<compile_context>
chip_gen: v7x
topology: tpu7x:2x2x1
jax: 0.10.0
libtpu: 0.0.40
codegen_flags: <defaults>
</compile_context>

<pallas_src>
import functools

import jax
import jax.numpy as jnp
from jax.experimental import pallas as pl
from jax.experimental.pallas import tpu as pltpu

LANE = 128  # TPU lane width; every padded segment width is a multiple of this.


def _round_up(n, m):
    return (n + m - 1) // m * m


def moe_kernel(x_ref, wf1_ref, bf1_ref, w2_ref, b2_ref, o_ref, *,
               num_experts, gate_pad, hidden_pad):
    """One grid step processes one tile of batch rows.

    x_ref  : (bt, T, F)        compute dtype (bf16 by default)
    wf1_ref: (F, G + E*Hp)     fused [gating (padded to G=128) | fc1 of all experts]
    bf1_ref: (1, G + E*Hp)     f32 fused biases
    w2_ref : (E, Hp, Op)       per-expert fc2 weights (H->Hp rows, O->Op cols zero-padded)
    b2_ref : (E, 1, Op)        f32 per-expert fc2 bias (zero-padded)
    o_ref  : (E, bt, Op)       f32, one lane-dense slab per expert
    """
    E, G, Hp = num_experts, gate_pad, hidden_pad
    x = x_ref[...]                                       # (bt, T, F)
    bt, t, f = x.shape

    # ---- fused gating + fc1: ONE MXU matmul over M = bt*T rows --------------
    xf = x.reshape(bt * t, f)                            # major-dim merge, free
    z = jnp.dot(xf, wf1_ref[...],
                preferred_element_type=jnp.float32) + bf1_ref[...]   # f32

    # ---- gating softmax over T (torch Softmax(dim=1)) ------------------------
    # Padded gate columns (>= E) are harmless: softmax is independent per
    # column and those columns are never read.  z[:, :G] is a 128-aligned view.
    logits = z[:, :G].reshape(bt, t, G)
    m = jnp.max(logits, axis=1, keepdims=True)
    ex = jnp.exp(logits - m)
    denom = jnp.sum(ex, axis=1, keepdims=True)           # (bt, 1, G)
    gate = ex * pl.reciprocal(denom, approx=True)        # (bt, t, G) f32

    # ---- expert hidden activations (f32 elementwise) -------------------------
    h = jnp.maximum(z[:, G:], 0.0)                       # (bt*t, E*Hp), aligned view

    # ---- per expert: hoisted T-reduction -> fc2 -> lane-dense store ----------
    # All slices below start at multiples of 128 lanes => free views; there is
    # no concatenate and no block-diagonal weight.
    # TODO(synk): for production-sized E*Hp, add an 'arbitrary' grid axis over
    # expert/hidden chunks with a VMEM accumulator instead of materializing z.
    for e in range(E):
        h_e = h[:, e * Hp:(e + 1) * Hp].reshape(bt, t, Hp)   # (bt, t, Hp)
        g_e = gate[:, :, e:e + 1]                            # (bt, t, 1)
        gh_e = jnp.sum(g_e * h_e, axis=1)                    # (bt, Hp) f32
        y_e = jnp.dot(gh_e.astype(w2_ref.dtype), w2_ref[e],
                      preferred_element_type=jnp.float32) + b2_ref[e]
        o_ref[e] = y_e                                       # contiguous (bt, Op) store


def _pick_batch_tile(B, T, target_rows=1024):
    """Aim for ~512-1024 flattened (bt*T) rows per grid step (85%+ of roofline);
    prefer >=2 grid steps when B allows so v7x's two TensorCores both get work."""
    if B * T <= target_rows:
        if B >= 16:
            half = -(-B // 2)
            return min(B, -(-half // 8) * 8)     # ~2 tiles, 8-aligned
        return B
    bt = max(8, (target_rows // max(T, 1)) // 8 * 8)
    return min(bt, B)


def moe_forward(x, wg, bg, w1, b1, w2, b2, *, batch_tile=None,
                compute_dtype=jnp.bfloat16):
    """x:(B,T,F); wg:(F,E); bg:(1,E); w1:(E,F,H); b1:(E,1,H); w2:(E,H,O); b2:(E,1,O).

    Linear weights are stored (in_features, out_features), i.e. transposed vs
    torch's nn.Linear.weight, so the kernel computes x @ W + b.
    """
    B, T, F = x.shape
    E, _, H = w1.shape
    O = w2.shape[2]

    G = LANE                       # gating segment padded E -> 128 (one lane tile)
    Hp = _round_up(H, LANE)        # per-expert hidden width padded to lane multiple
    Op = _round_up(O, LANE)        # output width padded so stores are lane-dense
    N1 = G + E * Hp

    f32 = jnp.float32
    # ---- fused fc1 weight [gating | fc1_e ...], zero-padded (XLA-side, once) --
    wf1 = jnp.zeros((F, N1), f32)
    wf1 = wf1.at[:, :E].set(wg.astype(f32))
    w1p = jnp.zeros((E, F, Hp), f32).at[:, :, :H].set(w1.astype(f32))
    wf1 = wf1.at[:, G:].set(jnp.transpose(w1p, (1, 0, 2)).reshape(F, E * Hp))
    wf1 = wf1.astype(compute_dtype)                      # bf16 MXU operand

    bf1 = jnp.zeros((1, N1), f32)                        # biases stay f32
    bf1 = bf1.at[0, :E].set(bg.reshape(E).astype(f32))
    b1p = jnp.zeros((E, Hp), f32).at[:, :H].set(b1.reshape(E, H).astype(f32))
    bf1 = bf1.at[0, G:].set(b1p.reshape(E * Hp))

    # ---- per-expert fc2 weights / bias, zero-padded ---------------------------
    w2p = jnp.zeros((E, Hp, Op), f32).at[:, :H, :O].set(w2.astype(f32))
    w2p = w2p.astype(compute_dtype)
    b2p = jnp.zeros((E, 1, Op), f32).at[:, 0, :O].set(b2.reshape(E, O).astype(f32))

    xc = x.astype(compute_dtype)

    bt = _pick_batch_tile(B, T) if batch_tile is None else batch_tile
    grid = (pl.cdiv(B, bt),)

    in_bytes = jnp.dtype(compute_dtype).itemsize
    # Per-step VMEM budget: 2x input tile + 2x output tile + resident
    # single-buffered weights + f32 fc1 activations + temporaries (headroom 2x).
    est = (2 * bt * T * F * in_bytes
           + 2 * E * bt * Op * 4
           + F * N1 * in_bytes + N1 * 4 + E * Hp * Op * in_bytes + E * Op * 4
           + 2 * bt * T * N1 * 4)
    vmem_limit = int(min(max(2 * est, 32 * 2 ** 20), 60 * 2 ** 20))  # <= v7x 64 MiB

    kernel = functools.partial(moe_kernel, num_experts=E, gate_pad=G,
                               hidden_pad=Hp)
    weight_mode = pl.Buffered(1)   # constant index_map -> no double buffering needed
    out = pl.pallas_call(
        kernel,
        out_shape=jax.ShapeDtypeStruct((E, B, Op), jnp.float32),
        grid=grid,
        in_specs=[
            pl.BlockSpec((bt, T, F), lambda i: (i, 0, 0)),               # batch tile
            pl.BlockSpec((F, N1), lambda i: (0, 0),
                         pipeline_mode=weight_mode),                     # fused fc1 W
            pl.BlockSpec((1, N1), lambda i: (0, 0),
                         pipeline_mode=weight_mode),                     # fused fc1 b
            pl.BlockSpec((E, Hp, Op), lambda i: (0, 0, 0),
                         pipeline_mode=weight_mode),                     # fc2 W
            pl.BlockSpec((E, 1, Op), lambda i: (0, 0, 0),
                         pipeline_mode=weight_mode),                     # fc2 b
        ],
        out_specs=pl.BlockSpec((E, bt, Op), lambda i: (0, i, 0)),        # lane-dense
        compiler_params=pltpu.CompilerParams(
            dimension_semantics=("parallel",),
            vmem_limit_bytes=vmem_limit),
    )(xc, wf1, bf1, w2p, b2p)

    # (E, B, Op) -> (B, E, O); tiny XLA transpose + slice outside the kernel.
    return jnp.transpose(out, (1, 0, 2))[:, :, :O]


def moe_reference(x, wg, bg, w1, b1, w2, b2):
    """Pure-JAX f32 reference mirroring the torch forward exactly."""
    logits = jnp.einsum('btf,fe->bte', x, wg) + bg[None, :, :]        # (B,T,E)
    gate = jax.nn.softmax(logits, axis=1)                             # dim=1
    ys = []
    for e in range(w1.shape[0]):
        h = jax.nn.relu(jnp.einsum('btf,fh->bth', x, w1[e]) + b1[e][None])
        ys.append(jnp.einsum('bth,ho->bto', h, w2[e]) + b2[e][None])
    y = jnp.stack(ys, axis=2)                                         # (B,T,E,O)
    return jnp.sum(gate[..., None] * y, axis=1)                       # (B,E,O)


if __name__ == "__main__":
    # Small shapes consistent with the module.
    B, T = 2, 8               # batch, sequence length (X_train dim 1)
    input_size = 16           # X_train.shape[2]
    hidden_size = 64
    output_size = 4           # y_train.shape[1]
    num_experts = 3

    key = jax.random.PRNGKey(0)
    kx, kwg, kbg, kw1, kb1, kw2, kb2 = jax.random.split(key, 7)

    x = jax.random.normal(kx, (B, T, input_size), jnp.float32)

    # Deterministic synthetic parameters (torch Linear weights, transposed).
    wg = 0.1 * jax.random.normal(kwg, (input_size, num_experts), jnp.float32)
    bg = 0.1 * jax.random.normal(kbg, (1, num_experts), jnp.float32)
    w1 = 0.1 * jax.random.normal(kw1, (num_experts, input_size, hidden_size), jnp.float32)
    b1 = 0.1 * jax.random.normal(kb1, (num_experts, 1, hidden_size), jnp.float32)
    w2 = 0.1 * jax.random.normal(kw2, (num_experts, hidden_size, output_size), jnp.float32)
    b2 = 0.1 * jax.random.normal(kb2, (num_experts, 1, output_size), jnp.float32)

    out = moe_forward(x, wg, bg, w1, b1, w2, b2)
    out = jax.block_until_ready(out)

    ref = moe_reference(x, wg, bg, w1, b1, w2, b2)
    assert out.shape == (B, num_experts, output_size)
    # Tolerance covers bf16 MXU operands (f32 accumulation) and the EUP
    # approx-reciprocal in the softmax denominator.
    assert jnp.allclose(out, ref, atol=3e-2, rtol=2e-2), "mismatch vs JAX reference"

    print("KERNEL_OK")
</pallas_src>

<mosaic_0001>
module attributes {stable_mosaic.version = 11 : i64} {
  func.func @moe_kernel(%arg0: i32, %arg1: memref<2x8x16xbf16, #tpu.memory_space<vmem>>, %arg2: memref<16x512xbf16, #tpu.memory_space<vmem>>, %arg3: memref<1x512xf32, #tpu.memory_space<vmem>>, %arg4: memref<3x128x128xbf16, #tpu.memory_space<vmem>>, %arg5: memref<3x1x128xf32, #tpu.memory_space<vmem>>, %arg6: memref<3x2x128xf32, #tpu.memory_space<vmem>>) attributes {dimension_semantics = [#tpu.dimension_semantics<parallel>], iteration_bounds = array<i64: 1>, scalar_prefetch = 0 : i64, scratch_operands = 0 : i64, tpu.core_type = #tpu.core_type<tc>, window_params = [{transform_indices = @transform_0, window_bounds = array<i64: 2, 8, 16>}, {pipeline_mode = #tpu.pipeline_mode<synchronous>, transform_indices = @transform_1, window_bounds = array<i64: 16, 512>}, {pipeline_mode = #tpu.pipeline_mode<synchronous>, transform_indices = @transform_2, window_bounds = array<i64: 1, 512>}, {pipeline_mode = #tpu.pipeline_mode<synchronous>, transform_indices = @transform_3, window_bounds = array<i64: 3, 128, 128>}, {pipeline_mode = #tpu.pipeline_mode<synchronous>, transform_indices = @transform_4, window_bounds = array<i64: 3, 1, 128>}, {transform_indices = @transform_5, window_bounds = array<i64: 3, 2, 128>}]} {
    %c0 = arith.constant 0 : index
    %c0_0 = arith.constant 0 : index
    %c0_1 = arith.constant 0 : index
    %0 = vector.load %arg1[%c0, %c0_0, %c0_1] : memref<2x8x16xbf16, #tpu.memory_space<vmem>>, vector<2x8x16xbf16>
    %1 = vector.shape_cast %0 : vector<2x8x16xbf16> to vector<16x16xbf16>
    %c0_2 = arith.constant 0 : index
    %c0_3 = arith.constant 0 : index
    %2 = vector.load %arg2[%c0_2, %c0_3] : memref<16x512xbf16, #tpu.memory_space<vmem>>, vector<16x512xbf16>
    %cst = arith.constant dense<0.000000e+00> : vector<16x512xf32>
    %3 = tpu.matmul %1, %2, %cst {dimension_numbers = #tpu.dot_dimension_numbers<[1], [0], [0], [1], [0, 0, 1, 1], [], []>} : vector<16x16xbf16>, vector<16x512xbf16>, vector<16x512xf32> -> vector<16x512xf32>
    %c0_4 = arith.constant 0 : index
    %c0_5 = arith.constant 0 : index
    %4 = vector.load %arg3[%c0_4, %c0_5] : memref<1x512xf32, #tpu.memory_space<vmem>>, vector<1x512xf32>
    %5 = vector.broadcast %4 : vector<1x512xf32> to vector<16x512xf32>
    %6 = arith.addf %3, %5 : vector<16x512xf32>
    %7 = vector.extract_strided_slice %6 {offsets = [0, 0], sizes = [16, 128], strides = [1, 1]} : vector<16x512xf32> to vector<16x128xf32>
    %8 = vector.shape_cast %7 : vector<16x128xf32> to vector<2x8x128xf32>
    %cst_6 = arith.constant dense<0xFF800000> : vector<2x128xf32>
    %9 = vector.multi_reduction <maximumf>, %8, %cst_6 [1] : vector<2x8x128xf32> to vector<2x128xf32>
    %10 = vector.shape_cast %9 : vector<2x128xf32> to vector<2x1x128xf32>
    %11 = vector.broadcast %10 : vector<2x1x128xf32> to vector<2x8x128xf32>
    %12 = arith.subf %8, %11 : vector<2x8x128xf32>
    %13 = math.exp %12 : vector<2x8x128xf32>
    %cst_7 = arith.constant dense<0.000000e+00> : vector<2x128xf32>
    %14 = vector.multi_reduction <add>, %13, %cst_7 [1] : vector<2x8x128xf32> to vector<2x128xf32>
    %15 = vector.shape_cast %14 : vector<2x128xf32> to vector<2x1x128xf32>
    %16 = tpu.reciprocal %15 {approx = true} : vector<2x1x128xf32> -> vector<2x1x128xf32>
    %17 = vector.broadcast %16 : vector<2x1x128xf32> to vector<2x8x128xf32>
    %18 = arith.mulf %13, %17 : vector<2x8x128xf32>
    %19 = vector.extract_strided_slice %6 {offsets = [0, 128], sizes = [16, 384], strides = [1, 1]} : vector<16x512xf32> to vector<16x384xf32>
    %cst_8 = arith.constant 0.000000e+00 : f32
    %20 = vector.broadcast %cst_8 : f32 to vector<16x384xf32>
    %21 = arith.maximumf %19, %20 : vector<16x384xf32>
    %22 = vector.extract_strided_slice %21 {offsets = [0, 0], sizes = [16, 128], strides = [1, 1]} : vector<16x384xf32> to vector<16x128xf32>
    %23 = vector.shape_cast %22 : vector<16x128xf32> to vector<2x8x128xf32>
    %24 = vector.extract_strided_slice %18 {offsets = [0, 0, 0], sizes = [2, 8, 1], strides = [1, 1, 1]} : vector<2x8x128xf32> to vector<2x8x1xf32>
    %25 = vector.broadcast %24 : vector<2x8x1xf32> to vector<2x8x128xf32>
    %26 = arith.mulf %25, %23 : vector<2x8x128xf32>
    %cst_9 = arith.constant dense<0.000000e+00> : vector<2x128xf32>
    %27 = vector.multi_reduction <add>, %26, %cst_9 [1] : vector<2x8x128xf32> to vector<2x128xf32>
    %28 = arith.truncf %27 : vector<2x128xf32> to vector<2x128xbf16>
    %c0_10 = arith.constant 0 : index
    %c0_11 = arith.constant 0 : index
    %c0_12 = arith.constant 0 : index
    %29 = vector.load %arg4[%c0_10, %c0_11, %c0_12] : memref<3x128x128xbf16, #tpu.memory_space<vmem>>, vector<1x128x128xbf16>
    %30 = vector.shape_cast %29 : vector<1x128x128xbf16> to vector<128x128xbf16>
    %cst_13 = arith.constant dense<0.000000e+00> : vector<2x128xf32>
    %31 = tpu.matmul %28, %30, %cst_13 {dimension_numbers = #tpu.dot_dimension_numbers<[1], [0], [0], [1], [0, 0, 1, 1], [], []>} : vector<2x128xbf16>, vector<128x128xbf16>, vector<2x128xf32> -> vector<2x128xf32>
    %c0_14 = arith.constant 0 : index
    %c0_15 = arith.constant 0 : index
    %c0_16 = arith.constant 0 : index
    %32 = vector.load %arg5[%c0_14, %c0_15, %c0_16] : memref<3x1x128xf32, #tpu.memory_space<vmem>>, vector<1x1x128xf32>
    %33 = vector.shape_cast %32 : vector<1x1x128xf32> to vector<1x128xf32>
    %34 = vector.broadcast %33 : vector<1x128xf32> to vector<2x128xf32>
    %35 = arith.addf %31, %34 : vector<2x128xf32>
    %c0_17 = arith.constant 0 : index
    %c0_18 = arith.constant 0 : index
    %c0_19 = arith.constant 0 : index
    %36 = vector.load %arg6[%c0_17, %c0_18, %c0_19] : memref<3x2x128xf32, #tpu.memory_space<vmem>>, vector<1x2x128xf32>
    %37 = vector.shape_cast %36 : vector<1x2x128xf32> to vector<2x128xf32>
    %38 = vector.shape_cast %35 : vector<2x128xf32> to vector<1x2x128xf32>
    tpu.vector_store %arg6[%c0_17, %c0_18, %c0_19], %38 {strides = array<i32>} : memref<3x2x128xf32, #tpu.memory_space<vmem>>, vector<1x2x128xf32>,
    %39 = vector.extract_strided_slice %21 {offsets = [0, 128], sizes = [16, 128], strides = [1, 1]} : vector<16x384xf32> to vector<16x128xf32>
    %40 = vector.shape_cast %39 : vector<16x128xf32> to vector<2x8x128xf32>
    %41 = vector.extract_strided_slice %18 {offsets = [0, 0, 1], sizes = [2, 8, 1], strides = [1, 1, 1]} : vector<2x8x128xf32> to vector<2x8x1xf32>
    %42 = vector.broadcast %41 : vector<2x8x1xf32> to vector<2x8x128xf32>
    %43 = arith.mulf %42, %40 : vector<2x8x128xf32>
    %cst_20 = arith.constant dense<0.000000e+00> : vector<2x128xf32>
    %44 = vector.multi_reduction <add>, %43, %cst_20 [1] : vector<2x8x128xf32> to vector<2x128xf32>
    %45 = arith.truncf %44 : vector<2x128xf32> to vector<2x128xbf16>
    %c1 = arith.constant 1 : index
    %c0_21 = arith.constant 0 : index
    %c0_22 = arith.constant 0 : index
    %46 = vector.load %arg4[%c1, %c0_21, %c0_22] : memref<3x128x128xbf16, #tpu.memory_space<vmem>>, vector<1x128x128xbf16>
    %47 = vector.shape_cast %46 : vector<1x128x128xbf16> to vector<128x128xbf16>
    %cst_23 = arith.constant dense<0.000000e+00> : vector<2x128xf32>
    %48 = tpu.matmul %45, %47, %cst_23 {dimension_numbers = #tpu.dot_dimension_numbers<[1], [0], [0], [1], [0, 0, 1, 1], [], []>} : vector<2x128xbf16>, vector<128x128xbf16>, vector<2x128xf32> -> vector<2x128xf32>
    %c1_24 = arith.constant 1 : index
    %c0_25 = arith.constant 0 : index
    %c0_26 = arith.constant 0 : index
    %49 = vector.load %arg5[%c1_24, %c0_25, %c0_26] : memref<3x1x128xf32, #tpu.memory_space<vmem>>, vector<1x1x128xf32>
    %50 = vector.shape_cast %49 : vector<1x1x128xf32> to vector<1x128xf32>
    %51 = vector.broadcast %50 : vector<1x128xf32> to vector<2x128xf32>
    %52 = arith.addf %48, %51 : vector<2x128xf32>
    %c1_27 = arith.constant 1 : index
    %c0_28 = arith.constant 0 : index
    %c0_29 = arith.constant 0 : index
    %53 = vector.load %arg6[%c1_27, %c0_28, %c0_29] : memref<3x2x128xf32, #tpu.memory_space<vmem>>, vector<1x2x128xf32>
    %54 = vector.shape_cast %53 : vector<1x2x128xf32> to vector<2x128xf32>
    %55 = vector.shape_cast %52 : vector<2x128xf32> to vector<1x2x128xf32>
    tpu.vector_store %arg6[%c1_27, %c0_28, %c0_29], %55 {strides = array<i32>} : memref<3x2x128xf32, #tpu.memory_space<vmem>>, vector<1x2x128xf32>,
    %56 = vector.extract_strided_slice %21 {offsets = [0, 256], sizes = [16, 128], strides = [1, 1]} : vector<16x384xf32> to vector<16x128xf32>
    %57 = vector.shape_cast %56 : vector<16x128xf32> to vector<2x8x128xf32>
    %58 = vector.extract_strided_slice %18 {offsets = [0, 0, 2], sizes = [2, 8, 1], strides = [1, 1, 1]} : vector<2x8x128xf32> to vector<2x8x1xf32>
    %59 = vector.broadcast %58 : vector<2x8x1xf32> to vector<2x8x128xf32>
    %60 = arith.mulf %59, %57 : vector<2x8x128xf32>
    %cst_30 = arith.constant dense<0.000000e+00> : vector<2x128xf32>
    %61 = vector.multi_reduction <add>, %60, %cst_30 [1] : vector<2x8x128xf32> to vector<2x128xf32>
    %62 = arith.truncf %61 : vector<2x128xf32> to vector<2x128xbf16>
    %c2 = arith.constant 2 : index
    %c0_31 = arith.constant 0 : index
    %c0_32 = arith.constant 0 : index
    %63 = vector.load %arg4[%c2, %c0_31, %c0_32] : memref<3x128x128xbf16, #tpu.memory_space<vmem>>, vector<1x128x128xbf16>
    %64 = vector.shape_cast %63 : vector<1x128x128xbf16> to vector<128x128xbf16>
    %cst_33 = arith.constant dense<0.000000e+00> : vector<2x128xf32>
    %65 = tpu.matmul %62, %64, %cst_33 {dimension_numbers = #tpu.dot_dimension_numbers<[1], [0], [0], [1], [0, 0, 1, 1], [], []>} : vector<2x128xbf16>, vector<128x128xbf16>, vector<2x128xf32> -> vector<2x128xf32>
    %c2_34 = arith.constant 2 : index
    %c0_35 = arith.constant 0 : index
    %c0_36 = arith.constant 0 : index
    %66 = vector.load %arg5[%c2_34, %c0_35, %c0_36] : memref<3x1x128xf32, #tpu.memory_space<vmem>>, vector<1x1x128xf32>
    %67 = vector.shape_cast %66 : vector<1x1x128xf32> to vector<1x128xf32>
    %68 = vector.broadcast %67 : vector<1x128xf32> to vector<2x128xf32>
    %69 = arith.addf %65, %68 : vector<2x128xf32>
    %c2_37 = arith.constant 2 : index
    %c0_38 = arith.constant 0 : index
    %c0_39 = arith.constant 0 : index
    %70 = vector.load %arg6[%c2_37, %c0_38, %c0_39] : memref<3x2x128xf32, #tpu.memory_space<vmem>>, vector<1x2x128xf32>
    %71 = vector.shape_cast %70 : vector<1x2x128xf32> to vector<2x128xf32>
    %72 = vector.shape_cast %69 : vector<2x128xf32> to vector<1x2x128xf32>
    tpu.vector_store %arg6[%c2_37, %c0_38, %c0_39], %72 {strides = array<i32>} : memref<3x2x128xf32, #tpu.memory_space<vmem>>, vector<1x2x128xf32>,
    return
  }
  func.func @transform_0(%arg0: i32) -> (i32, i32, i32) {
    %c0_i32 = arith.constant 0 : i32
    %c0_i32_0 = arith.constant 0 : i32
    %c0_i32_1 = arith.constant 0 : i32
    return %arg0, %c0_i32, %c0_i32_0 : i32, i32, i32
  }
  func.func @transform_1(%arg0: i32) -> (i32, i32) {
    %c0_i32 = arith.constant 0 : i32
    %c0_i32_0 = arith.constant 0 : i32
    %c0_i32_1 = arith.constant 0 : i32
    return %c0_i32, %c0_i32_0 : i32, i32
  }
  func.func @transform_2(%arg0: i32) -> (i32, i32) {
    %c0_i32 = arith.constant 0 : i32
    %c0_i32_0 = arith.constant 0 : i32
    %c0_i32_1 = arith.constant 0 : i32
    return %c0_i32, %c0_i32_0 : i32, i32
  }
  func.func @transform_3(%arg0: i32) -> (i32, i32, i32) {
    %c0_i32 = arith.constant 0 : i32
    %c0_i32_0 = arith.constant 0 : i32
    %c0_i32_1 = arith.constant 0 : i32
    %c0_i32_2 = arith.constant 0 : i32
    return %c0_i32, %c0_i32_0, %c0_i32_1 : i32, i32, i32
  }
  func.func @transform_4(%arg0: i32) -> (i32, i32, i32) {
    %c0_i32 = arith.constant 0 : i32
    %c0_i32_0 = arith.constant 0 : i32
    %c0_i32_1 = arith.constant 0 : i32
    %c0_i32_2 = arith.constant 0 : i32
    return %c0_i32, %c0_i32_0, %c0_i32_1 : i32, i32, i32
  }
  func.func @transform_5(%arg0: i32) -> (i32, i32, i32) {
    %c0_i32 = arith.constant 0 : i32
    %c0_i32_0 = arith.constant 0 : i32
    %c0_i32_1 = arith.constant 0 : i32
    return %c0_i32, %arg0, %c0_i32_0 : i32, i32, i32
  }
}

</mosaic_0001>

<llo_original>
// kernel: tpu_custom_call.1
$region0: #{tpu_custom_call.1}
  #allocation0 [shape = 'u32[]', space=smem, size = 0x4, offset = 0x4, fixed_abs, tag = 'smem constant byte address 0x4 - core index']
  #allocation1 [shape = 'u32[144,128]{1,0:T(1,128)}', space=vmem, size = 0x12000, scoped, tag = 'internal scratch']
  %s0 = inlined_call_operand.hbm [shape: bf16[2,8,16], index: 0, kind: input, shape index: {}]
  %s1 = inlined_call_operand.hbm [shape: bf16[16,512], index: 1, kind: input, shape index: {}]
  %s2 = inlined_call_operand.vmem [shape: f32[1,512], index: 2, kind: input, shape index: {}]
  %s3 = inlined_call_operand.hbm [shape: bf16[3,128,128], index: 3, kind: input, shape index: {}]
  %s4 = inlined_call_operand.vmem [shape: f32[3,1,128], index: 4, kind: input, shape index: {}]
  %s5 = inlined_call_operand.hbm [shape: f32[3,2,128], index: 5, kind: output, shape index: {}]
  %s6 = sld [smem:[#allocation0]]
  $region42: #{tpu_custom_call.1} parent=0
    _
  %s8 = ssub.s32 1, %s6
  %s9 = scalar_select 0, %s8, %s6
  $region1: #{tpu_custom_call.1} parent=0
    #allocation2 [shape = 'u8[4096]{0}', space=vmem, size = 0x1000, scoped, tag = 'input window, operand 0, single buffered']
    #allocation3 [shape = 's32[1]{0}', space=sflag, size = 0x4, scoped, tag = 'scoped memory for tpu_custom_call.1']
    #allocation4 [shape = 's32[1]{0}', space=sflag, size = 0x4, scoped, tag = 'scoped memory for tpu_custom_call.1']
    #allocation5 [shape = 'u8[16384]{0}', space=vmem, size = 0x4000, scoped, tag = 'input window, operand 1, single buffered']
    #allocation6 [shape = 's32[1]{0}', space=sflag, size = 0x4, scoped, tag = 'scoped memory for tpu_custom_call.1']
    #allocation7 [shape = 'u8[98304]{0}', space=vmem, size = 0x18000, scoped, tag = 'input window, operand 3, single buffered']
    #allocation8 [shape = 'u8[3072]{0}', space=vmem, size = 0xc00, scoped, tag = 'output window, operand 0, single buffered']
    %10 = vsyncpa [#allocation3], 0
    %11 = vsyncpa [#allocation6], 0
    %12 = vsyncpa [#allocation4], 0
    // Predicated region
    $region2: #{tpu_custom_call.1} parent=1 // pred_check
      _
    $region3: #{tpu_custom_call.1} parent=1 // pred_check_branch
      %14 = sbr.rel (0) target = $region5
    $region4: #{tpu_custom_call.1} parent=1 // pred_region
      %s16 = ssub.s32 128, 128
      %17 = vsyncadd [#allocation3], %s16
      %s18 = sshll.u32 [#allocation2], 4
      %s19 = int_to_ptr.vmem [resolvable:$true] %s18
      %24 = dma.hbm_to_vmem [thread:$0]  %s0, 128, %s19, [#allocation3], 64, 64, 4
    $region5: #{tpu_custom_call.1} parent=1 // pred_fallthru
      _
    // Predicated region
    $region6: #{tpu_custom_call.1} parent=1 // pred_check
      _
    $region7: #{tpu_custom_call.1} parent=1 // pred_check_branch
      %26 = sbr.rel (0) target = $region9
    $region8: #{tpu_custom_call.1} parent=1 // pred_region
      %s28 = ssub.s32 512, 512
      %29 = vsyncadd [#allocation6], %s28
      %s30 = sshll.u32 [#allocation5], 4
      %s31 = int_to_ptr.vmem [resolvable:$true] %s30
      %36 = dma.hbm_to_vmem [thread:$0]  %s1, 512, %s31, [#allocation6], 256, 256, 16
    $region9: #{tpu_custom_call.1} parent=1 // pred_fallthru
      _
    // Predicated region
    $region10: #{tpu_custom_call.1} parent=1 // pred_check
      _
    $region11: #{tpu_custom_call.1} parent=1 // pred_check_branch
      %38 = sbr.rel (0) target = $region13
    $region12: #{tpu_custom_call.1} parent=1 // pred_region
      _
    $region13: #{tpu_custom_call.1} parent=1 // pred_fallthru
      _
    // Predicated region
    $region14: #{tpu_custom_call.1} parent=1 // pred_check
      _
    $region15: #{tpu_custom_call.1} parent=1 // pred_check_branch
      %40 = sbr.rel (0) target = $region17
    $region16: #{tpu_custom_call.1} parent=1 // pred_region
      %s42 = ssub.s32 3072, 3072
      %43 = vsyncadd [#allocation6], %s42
      %s44 = sshll.u32 [#allocation7], 4
      %s45 = int_to_ptr.vmem [resolvable:$true] %s44
      %50 = dma.hbm_to_vmem [thread:$0]  %s3, 3072, %s45, [#allocation6], 64, 64, 4
    $region17: #{tpu_custom_call.1} parent=1 // pred_fallthru
      _
    // Predicated region
    $region18: #{tpu_custom_call.1} parent=1 // pred_check
      _
    $region19: #{tpu_custom_call.1} parent=1 // pred_check_branch
      %52 = sbr.rel (0) target = $region21
    $region20: #{tpu_custom_call.1} parent=1 // pred_region
      _
    $region21: #{tpu_custom_call.1} parent=1 // pred_fallthru
      _
    // Predicated region
    $region22: #{tpu_custom_call.1} parent=1 // pred_check
      _
    $region23: #{tpu_custom_call.1} parent=1 // pred_check_branch
      %54 = sbr.rel (0) target = $region25
    $region24: #{tpu_custom_call.1} parent=1 // pred_region
      %55 = dma.done [#allocation3], 128
    $region25: #{tpu_custom_call.1} parent=1 // pred_fallthru
      _
    // Predicated region
    $region26: #{tpu_custom_call.1} parent=1 // pred_check
      _
    $region27: #{tpu_custom_call.1} parent=1 // pred_check_branch
      %57 = sbr.rel (0) target = $region29
    $region28: #{tpu_custom_call.1} parent=1 // pred_region
      %58 = dma.done [#allocation6], 512
    $region29: #{tpu_custom_call.1} parent=1 // pred_fallthru
      _
    // Predicated region
    $region30: #{tpu_custom_call.1} parent=1 // pred_check
      _
    $region31: #{tpu_custom_call.1} parent=1 // pred_check_branch
      %60 = sbr.rel (0) target = $region33
    $region32: #{tpu_custom_call.1} parent=1 // pred_region
      %61 = dma.done [#allocation6], 3072
    $region33: #{tpu_custom_call.1} parent=1 // pred_fallthru
      _
    %v63 = vld [vmem:[#allocation2] sm:$0xf]
    %v64 = vld [vmem:[#allocation2 + $0x4] sm:$0xf]
    %v65 = vld [vmem:[#allocation5] sm:$0xff]
    %v66 = vld [vmem:[#allocation5 + $0x8] sm:$0xff]
    %v67 = vld [vmem:[#allocation5 + $0x10] sm:$0xff]
    %v68 = vld [vmem:[#allocation5 + $0x18] sm:$0xff]
    %v69 = vld [vmem:[%s2] sm:$0xf]
    %v71 = vlaneseq
    %v72 = vshrl.u32 %v71, 7
    %v73 = vsub.s32 0, %v72
    %v74 = vrot.slane %v69, %v73
    %v75 = vlaneseq
    %v76 = vshrl.u32 %v75, 7
    %v77 = vsub.s32 1, %v76
    %v78 = vrot.slane %v69, %v77
    %v79 = vlaneseq
    %v80 = vshrl.u32 %v79, 7
    %v81 = vsub.s32 2, %v80
    %v82 = vrot.slane %v69, %v81
    %v83 = vlaneseq
    %v84 = vshrl.u32 %v83, 7
    %v85 = vsub.s32 3, %v84
    %v86 = vrot.slane %v69, %v85
    %v93 = vunpack.c.l.b16 %v63
    %v94 = vunpack.c.l.b16 %v64
    %v95 = vpack.c.b16 %v94, %v93
    %v100 = vunpack.c.l.b16 %v65
    %v101 = vunpack.c.h.b16 %v65
    %v102 = vunpack.c.l.b16 %v66
    %v103 = vunpack.c.h.b16 %v66
    %v104 = vunpack.c.l.b16 %v67
    %v105 = vunpack.c.h.b16 %v67
    %v106 = vunpack.c.l.b16 %v68
    %v107 = vunpack.c.h.b16 %v68
    %v108 = vpack.c.b16 %v104, %v100
    %v109 = vpack.c.b16 %v105, %v101
    %v110 = vpack.c.b16 %v106, %v102
    %v111 = vpack.c.b16 %v107, %v103
    %vm116 = vcmask 130048
    %v118 = vsel %vm116, %v95, 0
    %120 = vmatprep.subr.bf16.mxu0 %v109
    %121 = vmatpush1.bf16.msra.mxu0 %v108
    %122 = vmatprep.subr.bf16.mxu0 0
    %123 = vmatpush1.bf16.msra.mxu0 0
    %124 = vmatprep.subr.bf16.mxu0 0
    %125 = vmatpush1.bf16.msra.mxu0 0
    %126 = vmatprep.subr.bf16.mxu0 0
    %127 = vmatpush1.bf16.msra.mxu0 0
    %128 = vmatprep.subr.bf16.mxu0 0
    %129 = vmatpush1.bf16.msra.mxu0 0
    %130 = vmatprep.subr.bf16.mxu0 0
    %131 = vmatpush1.bf16.msra.mxu0 0
    %132 = vmatprep.subr.bf16.mxu0 0
    %133 = vmatpush1.bf16.msra.mxu0 0
    %134 = vmatprep.subr.bf16.mxu0 0
    %135 = vmatpush1.bf16.msra.mxu0 0
    %136 = vmatprep.subr.bf16.mxu0 0
    %137 = vmatpush1.bf16.msra.mxu0 0
    %138 = vmatprep.subr.bf16.mxu0 0
    %139 = vmatpush1.bf16.msra.mxu0 0
    %140 = vmatprep.subr.bf16.mxu0 0
    %141 = vmatpush1.bf16.msra.mxu0 0
    %142 = vmatprep.subr.bf16.mxu0 0
    %143 = vmatpush1.bf16.msra.mxu0 0
    %144 = vmatprep.subr.bf16.mxu0 0
    %145 = vmatpush1.bf16.msra.mxu0 0
    %146 = vmatprep.subr.bf16.mxu0 0
    %147 = vmatpush1.bf16.msra.mxu0 0
    %148 = vmatprep.subr.bf16.mxu0 0
    %149 = vmatpush1.bf16.msra.mxu0 0
    %150 = vmatprep.subr.bf16.mxu0 0
    %151 = vmatpush1.bf16.msra.mxu0 0
    %152 = vmatprep.mubr.bf16.mxu0 0
    %153 = vmatmul.mubr.bf16.gmra.mrb[0].mxu0 %v118
    %v154 = vpop.f32.mrb[0].mxu0
    %v155 = vadd.f32 %v74, %v154
    %v156 = vpop.f32.mrb[0].mxu0
    %v157 = vadd.f32 %v78, %v156
    %v158 = vpop.f32.mrb[0].mxu0
    %v159 = vadd.f32 %v74, %v158
    %v160 = vpop.f32.mrb[0].mxu0
    %v161 = vadd.f32 %v78, %v160
    %162 = vdwg.mxu0
    %163 = vmatprep.subr.bf16.mxu0 %v111
    %164 = vmatpush1.bf16.msra.mxu0 %v110
    %165 = vmatprep.subr.bf16.mxu0 0
    %166 = vmatpush1.bf16.msra.mxu0 0
    %167 = vmatprep.subr.bf16.mxu0 0
    %168 = vmatpush1.bf16.msra.mxu0 0
    %169 = vmatprep.subr.bf16.mxu0 0
    %170 = vmatpush1.bf16.msra.mxu0 0
    %171 = vmatprep.subr.bf16.mxu0 0
    %172 = vmatpush1.bf16.msra.mxu0 0
    %173 = vmatprep.subr.bf16.mxu0 0
    %174 = vmatpush1.bf16.msra.mxu0 0
    %175 = vmatprep.subr.bf16.mxu0 0
    %176 = vmatpush1.bf16.msra.mxu0 0
    %177 = vmatprep.subr.bf16.mxu0 0
    %178 = vmatpush1.bf16.msra.mxu0 0
    %179 = vmatprep.subr.bf16.mxu0 0
    %180 = vmatpush1.bf16.msra.mxu0 0
    %181 = vmatprep.subr.bf16.mxu0 0
    %182 = vmatpush1.bf16.msra.mxu0 0
    %183 = vmatprep.subr.bf16.mxu0 0
    %184 = vmatpush1.bf16.msra.mxu0 0
    %185 = vmatprep.subr.bf16.mxu0 0
    %186 = vmatpush1.bf16.msra.mxu0 0
    %187 = vmatprep.subr.bf16.mxu0 0
    %188 = vmatpush1.bf16.msra.mxu0 0
    %189 = vmatprep.subr.bf16.mxu0 0
    %190 = vmatpush1.bf16.msra.mxu0 0
    %191 = vmatprep.subr.bf16.mxu0 0
    %192 = vmatpush1.bf16.msra.mxu0 0
    %193 = vmatprep.subr.bf16.mxu0 0
    %194 = vmatpush1.bf16.msra.mxu0 0
    %195 = vmatprep.mubr.bf16.mxu0 0
    %196 = vmatmul.mubr.bf16.gmra.mrb[0].mxu0 %v118
    %v197 = vpop.f32.mrb[0].mxu0
    %v198 = vadd.f32 %v82, %v197
    %v199 = vpop.f32.mrb[0].mxu0
    %v200 = vadd.f32 %v86, %v199
    %v201 = vpop.f32.mrb[0].mxu0
    %v202 = vadd.f32 %v82, %v201
    %v203 = vpop.f32.mrb[0].mxu0
    %v204 = vadd.f32 %v86, %v203
    %205 = vdwg.mxu0
    %v206 = vrot.slane %v155, 4
    %v207 = vmax.f32 %v155, %v206
    %v208 = vrot.slane %v207, 2
    %v209 = vmax.f32 %v207, %v208
    %v210 = vrot.slane %v209, 1
    %v211 = vmax.f32 %v209, %v210
    %v212 = vrot.slane %v159, 4
    %v213 = vmax.f32 %v159, %v212
    %v214 = vrot.slane %v213, 2
    %v215 = vmax.f32 %v213, %v214
    %v216 = vrot.slane %v215, 1
    %v217 = vmax.f32 %v215, %v216
    %v218 = vsub.f32 %v155, %v211
    %v219 = vsub.f32 %v159, %v217
    %v220 = vmul.f32 %v218, 1.442695
    %v221 = vpow.pop %v220
    %v222 = vmul.f32 %v219, 1.442695
    %v223 = vpow.pop %v222
    %v224 = vrot.slane %v221, 4
    %v225 = vadd.f32 %v221, %v224
    %v226 = vrot.slane %v225, 2
    %v227 = vadd.f32 %v225, %v226
    %v228 = vrot.slane %v227, 1
    %v229 = vadd.f32 %v227, %v228
    %v230 = vrot.slane %v223, 4
    %v231 = vadd.f32 %v223, %v230
    %v232 = vrot.slane %v231, 2
    %v233 = vadd.f32 %v231, %v232
    %v234 = vrot.slane %v233, 1
    %v235 = vadd.f32 %v233, %v234
    %v236 = vrcp.pop %v229
    %v237 = vrcp.pop %v235
    %v238 = vmul.f32 %v221, %v236
    %v239 = vmul.f32 %v223, %v237
    %v240 = vmax.f32 %v157, 0.0
    %v241 = vmax.f32 %v198, 0.0
    %v242 = vmax.f32 %v200, 0.0
    %v243 = vmax.f32 %v161, 0.0
    %v244 = vmax.f32 %v202, 0.0
    %v245 = vmax.f32 %v204, 0.0
    %247 = vset.pattern.permute.xlu0 0
    %248 = vperm.xlu0 %247, %v238
    %v249 = vpop.permute.xlu0 %248
    %252 = vset.pattern.permute.xlu0 0
    %253 = vperm.xlu0 %252, %v239
    %v254 = vpop.permute.xlu0 %253
    %v256 = vmul.f32 %v249, %v240
    %v257 = vmul.f32 %v254, %v243
    %v258 = vrot.slane %v256, 4
    %v259 = vadd.f32 %v256, %v258
    %v260 = vrot.slane %v259, 2
    %v261 = vadd.f32 %v259, %v260
    %v262 = vrot.slane %v261, 1
    %v263 = vadd.f32 %v261, %v262
    %v264 = vrot.slane %v257, 4
    %v265 = vadd.f32 %v257, %v264
    %v266 = vrot.slane %v265, 2
    %v267 = vadd.f32 %v265, %v266
    %v268 = vrot.slane %v267, 1
    %v269 = vadd.f32 %v267, %v268
    %v270 = vpack.c.bf16 %v263, %v263
    %v271 = vpack.c.bf16 %v269, %v269
    %v272 = vld [vmem:[#allocation7] sm:$0xf]
    %v273 = vld [vmem:[#allocation7 + $0x4] sm:$0xf]
    %v274 = vld [vmem:[#allocation7 + $0x8] sm:$0xf]
    %v275 = vld [vmem:[#allocation7 + $0xc] sm:$0xf]
    %v276 = vld [vmem:[#allocation7 + $0x10] sm:$0xf]
    %v277 = vld [vmem:[#allocation7 + $0x14] sm:$0xf]
    %v278 = vld [vmem:[#allocation7 + $0x18] sm:$0xf]
    %v279 = vld [vmem:[#allocation7 + $0x1c] sm:$0xf]
    %v280 = vld [vmem:[#allocation7 + $0x20] sm:$0xf]
    %v281 = vld [vmem:[#allocation7 + $0x24] sm:$0xf]
    %v282 = vld [vmem:[#allocation7 + $0x28] sm:$0xf]
    %v283 = vld [vmem:[#allocation7 + $0x2c] sm:$0xf]
    %v284 = vld [vmem:[#allocation7 + $0x30] sm:$0xf]
    %v285 = vld [vmem:[#allocation7 + $0x34] sm:$0xf]
    %v286 = vld [vmem:[#allocation7 + $0x38] sm:$0xf]
    %v287 = vld [vmem:[#allocation7 + $0x3c] sm:$0xf]
    %v288 = vld [vmem:[%s4] sm:$0x1]
    %v290 = vlaneseq
    %v291 = vshrl.u32 %v290, 7
    %v292 = vsub.s32 0, %v291
    %v293 = vrot.slane %v288, %v292
    %v297 = vunpack.c.l.b16 %v270
    %v298 = vunpack.c.l.b16 %v271
    %vm299 = vcmask 1041409
    %v300 = vsel %vm299, %v298, %v297
    %v301 = vpack.c.b16 %v300, %v300
    %v319 = vunpack.c.l.b16 %v272
    %v320 = vunpack.c.l.b16 %v273
    %v321 = vunpack.c.l.b16 %v274
    %v322 = vunpack.c.l.b16 %v275
    %v323 = vunpack.c.l.b16 %v276
    %v324 = vunpack.c.l.b16 %v277
    %v325 = vunpack.c.l.b16 %v278
    %v326 = vunpack.c.l.b16 %v279
    %v327 = vunpack.c.l.b16 %v280
    %v328 = vunpack.c.l.b16 %v281
    %v329 = vunpack.c.l.b16 %v282
    %v330 = vunpack.c.l.b16 %v283
    %v331 = vunpack.c.l.b16 %v284
    %v332 = vunpack.c.l.b16 %v285
    %v333 = vunpack.c.l.b16 %v286
    %v334 = vunpack.c.l.b16 %v287
    %v335 = vpack.c.b16 %v320, %v319
    %v336 = vpack.c.b16 %v322, %v321
    %v337 = vpack.c.b16 %v324, %v323
    %v338 = vpack.c.b16 %v326, %v325
    %v339 = vpack.c.b16 %v328, %v327
    %v340 = vpack.c.b16 %v330, %v329
    %v341 = vpack.c.b16 %v332, %v331
    %v342 = vpack.c.b16 %v334, %v333
    %351 = vmatprep.subr.bf16.mxu0 0
    %352 = vmatpush1.bf16.msra.mxu0 %v335
    %353 = vmatprep.subr.bf16.mxu0 0
    %354 = vmatpush1.bf16.msra.mxu0 %v336
    %355 = vmatprep.subr.bf16.mxu0 0
    %356 = vmatpush1.bf16.msra.mxu0 %v337
    %357 = vmatprep.subr.bf16.mxu0 0
    %358 = vmatpush1.bf16.msra.mxu0 %v338
    %359 = vmatprep.subr.bf16.mxu0 0
    %360 = vmatpush1.bf16.msra.mxu0 %v339
    %361 = vmatprep.subr.bf16.mxu0 0
    %362 = vmatpush1.bf16.msra.mxu0 %v340
    %363 = vmatprep.subr.bf16.mxu0 0
    %364 = vmatpush1.bf16.msra.mxu0 %v341
    %365 = vmatprep.subr.bf16.mxu0 0
    %366 = vmatpush1.bf16.msra.mxu0 %v342
    %367 = vmatprep.subr.bf16.mxu0 0
    %368 = vmatpush1.bf16.msra.mxu0 0
    %369 = vmatprep.subr.bf16.mxu0 0
    %370 = vmatpush1.bf16.msra.mxu0 0
    %371 = vmatprep.subr.bf16.mxu0 0
    %372 = vmatpush1.bf16.msra.mxu0 0
    %373 = vmatprep.subr.bf16.mxu0 0
    %374 = vmatpush1.bf16.msra.mxu0 0
    %375 = vmatprep.subr.bf16.mxu0 0
    %376 = vmatpush1.bf16.msra.mxu0 0
    %377 = vmatprep.subr.bf16.mxu0 0
    %378 = vmatpush1.bf16.msra.mxu0 0
    %379 = vmatprep.subr.bf16.mxu0 0
    %380 = vmatpush1.bf16.msra.mxu0 0
    %381 = vmatprep.subr.bf16.mxu0 0
    %382 = vmatpush1.bf16.msra.mxu0 0
    %383 = vmatprep.mubr.bf16.mxu0 0
    %384 = vmatmul.mubr.bf16.gmra.mrb[0].mxu0 %v301
    %v385 = vpop.f32.mrb[0].mxu0
    %v386 = vadd.f32 %v293, %v385
    %v387 = vpop.f32.mrb[0].mxu0
    %v388 = vpop.f32.mrb[0].mxu0
    %v389 = vpop.f32.mrb[0].mxu0
    %390 = vdwg.mxu0
    %391 = vst [vmem:[#allocation8] sm:$0x3] %v386
    %392 = vset.pattern.permute.xlu0 1
    %393 = vperm.xlu0 %392, %v238
    %v394 = vpop.permute.xlu0 %393
    %396 = vset.pattern.permute.xlu0 1
    %397 = vperm.xlu0 %396, %v239
    %v398 = vpop.permute.xlu0 %397
    %v400 = vmul.f32 %v394, %v241
    %v401 = vmul.f32 %v398, %v244
    %v402 = vrot.slane %v400, 4
    %v403 = vadd.f32 %v400, %v402
    %v404 = vrot.slane %v403, 2
    %v405 = vadd.f32 %v403, %v404
    %v406 = vrot.slane %v405, 1
    %v407 = vadd.f32 %v405, %v406
    %v408 = vrot.slane %v401, 4
    %v409 = vadd.f32 %v401, %v408
    %v410 = vrot.slane %v409, 2
    %v411 = vadd.f32 %v409, %v410
    %v412 = vrot.slane %v411, 1
    %v413 = vadd.f32 %v411, %v412
    %v414 = vpack.c.bf16 %v407, %v407
    %v415 = vpack.c.bf16 %v413, %v413
    %s416 = scalar_lea.vmem [#allocation7], 64
    %v417 = vld [vmem:[%s416] sm:$0xf]
    %v418 = vld [vmem:[%s416 + $0x4] sm:$0xf]
    %v419 = vld [vmem:[%s416 + $0x8] sm:$0xf]
    %v420 = vld [vmem:[%s416 + $0xc] sm:$0xf]
    %v421 = vld [vmem:[%s416 + $0x10] sm:$0xf]
    %v422 = vld [vmem:[%s416 + $0x14] sm:$0xf]
    %v423 = vld [vmem:[%s416 + $0x18] sm:$0xf]
    %v424 = vld [vmem:[%s416 + $0x1c] sm:$0xf]
    %v425 = vld [vmem:[%s416 + $0x20] sm:$0xf]
    %v426 = vld [vmem:[%s416 + $0x24] sm:$0xf]
    %v427 = vld [vmem:[%s416 + $0x28] sm:$0xf]
    %v428 = vld [vmem:[%s416 + $0x2c] sm:$0xf]
    %v429 = vld [vmem:[%s416 + $0x30] sm:$0xf]
    %v430 = vld [vmem:[%s416 + $0x34] sm:$0xf]
    %v431 = vld [vmem:[%s416 + $0x38] sm:$0xf]
    %v432 = vld [vmem:[%s416 + $0x3c] sm:$0xf]
    %s433 = scalar_lea.vmem %s4, 1
    %v434 = vld [vmem:[%s433] sm:$0x1]
    %v436 = vlaneseq
    %v437 = vshrl.u32 %v436, 7
    %v438 = vsub.s32 0, %v437
    %v439 = vrot.slane %v434, %v438
    %v443 = vunpack.c.l.b16 %v414
    %v444 = vunpack.c.l.b16 %v415
    %v445 = vsel %vm299, %v444, %v443
    %v446 = vpack.c.b16 %v445, %v445
    %v464 = vunpack.c.l.b16 %v417
    %v465 = vunpack.c.l.b16 %v418
    %v466 = vunpack.c.l.b16 %v419
    %v467 = vunpack.c.l.b16 %v420
    %v468 = vunpack.c.l.b16 %v421
    %v469 = vunpack.c.l.b16 %v422
    %v470 = vunpack.c.l.b16 %v423
    %v471 = vunpack.c.l.b16 %v424
    %v472 = vunpack.c.l.b16 %v425
    %v473 = vunpack.c.l.b16 %v426
    %v474 = vunpack.c.l.b16 %v427
    %v475 = vunpack.c.l.b16 %v428
    %v476 = vunpack.c.l.b16 %v429
    %v477 = vunpack.c.l.b16 %v430
    %v478 = vunpack.c.l.b16 %v431
    %v479 = vunpack.c.l.b16 %v432
    %v480 = vpack.c.b16 %v465, %v464
    %v481 = vpack.c.b16 %v467, %v466
    %v482 = vpack.c.b16 %v469, %v468
    %v483 = vpack.c.b16 %v471, %v470
    %v484 = vpack.c.b16 %v473, %v472
    %v485 = vpack.c.b16 %v475, %v474
    %v486 = vpack.c.b16 %v477, %v476
    %v487 = vpack.c.b16 %v479, %v478
    %496 = vmatprep.subr.bf16.mxu0 0
    %497 = vmatpush1.bf16.msra.mxu0 %v480
    %498 = vmatprep.subr.bf16.mxu0 0
    %499 = vmatpush1.bf16.msra.mxu0 %v481
    %500 = vmatprep.subr.bf16.mxu0 0
    %501 = vmatpush1.bf16.msra.mxu0 %v482
    %502 = vmatprep.subr.bf16.mxu0 0
    %503 = vmatpush1.bf16.msra.mxu0 %v483
    %504 = vmatprep.subr.bf16.mxu0 0
    %505 = vmatpush1.bf16.msra.mxu0 %v484
    %506 = vmatprep.subr.bf16.mxu0 0
    %507 = vmatpush1.bf16.msra.mxu0 %v485
    %508 = vmatprep.subr.bf16.mxu0 0
    %509 = vmatpush1.bf16.msra.mxu0 %v486
    %510 = vmatprep.subr.bf16.mxu0 0
    %511 = vmatpush1.bf16.msra.mxu0 %v487
    %512 = vmatprep.subr.bf16.mxu0 0
    %513 = vmatpush1.bf16.msra.mxu0 0
    %514 = vmatprep.subr.bf16.mxu0 0
    %515 = vmatpush1.bf16.msra.mxu0 0
    %516 = vmatprep.subr.bf16.mxu0 0
    %517 = vmatpush1.bf16.msra.mxu0 0
    %518 = vmatprep.subr.bf16.mxu0 0
    %519 = vmatpush1.bf16.msra.mxu0 0
    %520 = vmatprep.subr.bf16.mxu0 0
    %521 = vmatpush1.bf16.msra.mxu0 0
    %522 = vmatprep.subr.bf16.mxu0 0
    %523 = vmatpush1.bf16.msra.mxu0 0
    %524 = vmatprep.subr.bf16.mxu0 0
    %525 = vmatpush1.bf16.msra.mxu0 0
    %526 = vmatprep.subr.bf16.mxu0 0
    %527 = vmatpush1.bf16.msra.mxu0 0
    %528 = vmatprep.mubr.bf16.mxu0 0
    %529 = vmatmul.mubr.bf16.gmra.mrb[0].mxu0 %v446
    %v530 = vpop.f32.mrb[0].mxu0
    %v531 = vadd.f32 %v439, %v530
    %v532 = vpop.f32.mrb[0].mxu0
    %v533 = vpop.f32.mrb[0].mxu0
    %v534 = vpop.f32.mrb[0].mxu0
    %535 = vdwg.mxu0
    %s536 = scalar_lea.vmem [#allocation8], 2
    %537 = vst [vmem:[%s536] sm:$0x3] %v531
    %538 = vset.pattern.permute.xlu0 2
    %539 = vperm.xlu0 %538, %v238
    %v540 = vpop.permute.xlu0 %539
    %542 = vset.pattern.permute.xlu0 2
    %543 = vperm.xlu0 %542, %v239
    %v544 = vpop.permute.xlu0 %543
    %v546 = vmul.f32 %v540, %v242
    %v547 = vmul.f32 %v544, %v245
    %v548 = vrot.slane %v546, 4
    %v549 = vadd.f32 %v546, %v548
    %v550 = vrot.slane %v549, 2
    %v551 = vadd.f32 %v549, %v550
    %v552 = vrot.slane %v551, 1
    %v553 = vadd.f32 %v551, %v552
    %v554 = vrot.slane %v547, 4
    %v555 = vadd.f32 %v547, %v554
    %v556 = vrot.slane %v555, 2
    %v557 = vadd.f32 %v555, %v556
    %v558 = vrot.slane %v557, 1
    %v559 = vadd.f32 %v557, %v558
    %v560 = vpack.c.bf16 %v553, %v553
    %v561 = vpack.c.bf16 %v559, %v559
    %s562 = scalar_lea.vmem [#allocation7], 128
    %v563 = vld [vmem:[%s562] sm:$0xf]
    %v564 = vld [vmem:[%s562 + $0x4] sm:$0xf]
    %v565 = vld [vmem:[%s562 + $0x8] sm:$0xf]
    %v566 = vld [vmem:[%s562 + $0xc] sm:$0xf]
    %v567 = vld [vmem:[%s562 + $0x10] sm:$0xf]
    %v568 = vld [vmem:[%s562 + $0x14] sm:$0xf]
    %v569 = vld [vmem:[%s562 + $0x18] sm:$0xf]
    %v570 = vld [vmem:[%s562 + $0x1c] sm:$0xf]
    %v571 = vld [vmem:[%s562 + $0x20] sm:$0xf]
    %v572 = vld [vmem:[%s562 + $0x24] sm:$0xf]
    %v573 = vld [vmem:[%s562 + $0x28] sm:$0xf]
    %v574 = vld [vmem:[%s562 + $0x2c] sm:$0xf]
    %v575 = vld [vmem:[%s562 + $0x30] sm:$0xf]
    %v576 = vld [vmem:[%s562 + $0x34] sm:$0xf]
    %v577 = vld [vmem:[%s562 + $0x38] sm:$0xf]
    %v578 = vld [vmem:[%s562 + $0x3c] sm:$0xf]
    %s579 = scalar_lea.vmem %s4, 2
    %v580 = vld [vmem:[%s579] sm:$0x1]
    %v582 = vlaneseq
    %v583 = vshrl.u32 %v582, 7
    %v584 = vsub.s32 0, %v583
    %v585 = vrot.slane %v580, %v584
    %v589 = vunpack.c.l.b16 %v560
    %v590 = vunpack.c.l.b16 %v561
    %v591 = vsel %vm299, %v590, %v589
    %v592 = vpack.c.b16 %v591, %v591
    %v610 = vunpack.c.l.b16 %v563
    %v611 = vunpack.c.l.b16 %v564
    %v612 = vunpack.c.l.b16 %v565
    %v613 = vunpack.c.l.b16 %v566
    %v614 = vunpack.c.l.b16 %v567
    %v615 = vunpack.c.l.b16 %v568
    %v616 = vunpack.c.l.b16 %v569
    %v617 = vunpack.c.l.b16 %v570
    %v618 = vunpack.c.l.b16 %v571
    %v619 = vunpack.c.l.b16 %v572
    %v620 = vunpack.c.l.b16 %v573
    %v621 = vunpack.c.l.b16 %v574
    %v622 = vunpack.c.l.b16 %v575
    %v623 = vunpack.c.l.b16 %v576
    %v624 = vunpack.c.l.b16 %v577
    %v625 = vunpack.c.l.b16 %v578
    %v626 = vpack.c.b16 %v611, %v610
    %v627 = vpack.c.b16 %v613, %v612
    %v628 = vpack.c.b16 %v615, %v614
    %v629 = vpack.c.b16 %v617, %v616
    %v630 = vpack.c.b16 %v619, %v618
    %v631 = vpack.c.b16 %v621, %v620
    %v632 = vpack.c.b16 %v623, %v622
    %v633 = vpack.c.b16 %v625, %v624
    %642 = vmatprep.subr.bf16.mxu0 0
    %643 = vmatpush1.bf16.msra.mxu0 %v626
    %644 = vmatprep.subr.bf16.mxu0 0
    %645 = vmatpush1.bf16.msra.mxu0 %v627
    %646 = vmatprep.subr.bf16.mxu0 0
    %647 = vmatpush1.bf16.msra.mxu0 %v628
    %648 = vmatprep.subr.bf16.mxu0 0
    %649 = vmatpush1.bf16.msra.mxu0 %v629
    %650 = vmatprep.subr.bf16.mxu0 0
    %651 = vmatpush1.bf16.msra.mxu0 %v630
    %652 = vmatprep.subr.bf16.mxu0 0
    %653 = vmatpush1.bf16.msra.mxu0 %v631
    %654 = vmatprep.subr.bf16.mxu0 0
    %655 = vmatpush1.bf16.msra.mxu0 %v632
    %656 = vmatprep.subr.bf16.mxu0 0
    %657 = vmatpush1.bf16.msra.mxu0 %v633
    %658 = vmatprep.subr.bf16.mxu0 0
    %659 = vmatpush1.bf16.msra.mxu0 0
    %660 = vmatprep.subr.bf16.mxu0 0
    %661 = vmatpush1.bf16.msra.mxu0 0
    %662 = vmatprep.subr.bf16.mxu0 0
    %663 = vmatpush1.bf16.msra.mxu0 0
    %664 = vmatprep.subr.bf16.mxu0 0
    %665 = vmatpush1.bf16.msra.mxu0 0
    %666 = vmatprep.subr.bf16.mxu0 0
    %667 = vmatpush1.bf16.msra.mxu0 0
    %668 = vmatprep.subr.bf16.mxu0 0
    %669 = vmatpush1.bf16.msra.mxu0 0
    %670 = vmatprep.subr.bf16.mxu0 0
    %671 = vmatpush1.bf16.msra.mxu0 0
    %672 = vmatprep.subr.bf16.mxu0 0
    %673 = vmatpush1.bf16.msra.mxu0 0
    %674 = vmatprep.mubr.bf16.mxu0 0
    %675 = vmatmul.mubr.bf16.gmra.mrb[0].mxu0 %v592
    %v676 = vpop.f32.mrb[0].mxu0
    %v677 = vadd.f32 %v585, %v676
    %v678 = vpop.f32.mrb[0].mxu0
    %v679 = vpop.f32.mrb[0].mxu0
    %v680 = vpop.f32.mrb[0].mxu0
    %681 = vdwg.mxu0
    %s682 = scalar_lea.vmem [#allocation8], 4
    %683 = vst [vmem:[%s682] sm:$0x3] %v677
    // Predicated region
    $region34: #{tpu_custom_call.1} parent=1 // pred_check
      _
    $region35: #{tpu_custom_call.1} parent=1 // pred_check_branch
      %685 = sbr.rel (0) target = $region37
    $region36: #{tpu_custom_call.1} parent=1 // pred_region
      %s687 = ssub.s32 96, 96
      %688 = vsyncadd [#allocation4], %s687
      %s689 = sshll.u32 [#allocation8], 4
      %s690 = int_to_ptr.vmem [resolvable:$true] %s689
      %695 = dma.vmem_to_hbm [thread:$0]  %s690, 96, %s5, [#allocation4], 32, 32, 2
    $region37: #{tpu_custom_call.1} parent=1 // pred_fallthru
      _
    // Predicated region
    $region38: #{tpu_custom_call.1} parent=1 // pred_check
      _
    $region39: #{tpu_custom_call.1} parent=1 // pred_check_branch
      %697 = sbr.rel (0) target = $region41
    $region40: #{tpu_custom_call.1} parent=1 // pred_region
      %698 = dma.done [#allocation4], 96
    $region41: #{tpu_custom_call.1} parent=1 // pred_fallthru
      _
    %699 = vsyncpa [#allocation3], 1
    %700 = vsyncpa [#allocation6], 1
    %701 = vsyncpa [#allocation4], 1

</llo_original>
